<compile_context>
chip_gen: v7x
topology: tpu7x:2x2x1
jax: 0.10.0
libtpu: 0.0.40
codegen_flags: <defaults>
</compile_context>

<pallas_src>
import jax
import jax.numpy as jnp
from jax import lax
from jax.experimental import pallas as pl
from jax.experimental.pallas import tpu as pltpu


# ----------------------------------------------------------------------------
# Fused kernel: conv3x3(pad=1)+bias+ReLU -> flatten -> [priors | value] heads
# ----------------------------------------------------------------------------
def amphisbaena_fused_kernel(x_ref, wband_ref, bconv_ref, wht_ref, bh_ref,
                             out_ref):
    # x_ref     : (B*H, Kpad)       bf16  kh-band-concatenated, K-padded lhs
    # wband_ref : (Kpad, W*Cout)    bf16  banded conv weight
    # bconv_ref : (1, W*Cout)       f32   conv bias tiled over W
    # wht_ref   : (A+1, H*W*Cout)   bf16  [priors|value] head weight, transposed,
    #                                     cols in the kernel's (h, w, c) order
    # bh_ref    : (1, A+1)          f32
    # out_ref   : (B, A+1)          f32   cols 0..A-1 = priors, col A = value
    B, A1 = out_ref.shape
    A = A1 - 1
    BH = x_ref.shape[0]
    WC = wband_ref.shape[1]
    H = BH // B

    # ---- conv: one aligned MXU matmul; bias + ReLU in f32 ----
    acc = jnp.dot(x_ref[...], wband_ref[...],
                  preferred_element_type=jnp.float32)          # (B*H, W*Cout)
    feat = jnp.maximum(acc + bconv_ref[...], 0.0)              # stays in VMEM

    # ---- fused value/prior heads: one NT matmul over K = H*W*Cout ----
    feat2 = feat.reshape(B, H * WC).astype(jnp.bfloat16)       # (B, F)
    out = lax.dot_general(feat2, wht_ref[...],
                          dimension_numbers=(((1,), (1,)), ((), ())),
                          preferred_element_type=jnp.float32)  # (B, A+1)
    out = out + bh_ref[...]

    # priors = softmax(logits); value = tanh(v)   (f32 epilogue)
    logits = out[:, 0:A]
    m = jnp.max(logits, axis=-1, keepdims=True)
    e = jnp.exp(logits - m)
    denom = jnp.sum(e, axis=-1, keepdims=True)
    out_ref[:, 0:A] = e * pl.reciprocal(denom, approx=True)
    out_ref[:, A:A1] = jnp.tanh(out[:, A:A1])


# ----------------------------------------------------------------------------
# One-time weight packing (hoisted out of the per-call jitted forward)
# ----------------------------------------------------------------------------
def prepare_params(conv_w, conv_b, w_val, b_val, w_pri, b_pri, H, W):
    _, _, Cin, Cout = conv_w.shape
    Wp = W + 2
    A = w_pri.shape[1]

    # banded conv weight:
    #   wband[kh*Wp*Cin + wp*Cin + ci, w*Cout + c] = conv_w[kh, wp-w, ci, c]
    #   (zero when wp - w is outside [0, 3))
    wband5 = jnp.stack(
        [jnp.pad(conv_w, ((0, 0), (w, Wp - 3 - w), (0, 0), (0, 0)))
         for w in range(W)],
        axis=3)                                        # (3, Wp, Cin, W, Cout)
    K = 3 * Wp * Cin
    Kpad = ((K + 255) // 256) * 256                    # align to MXU K tile
    wband = jnp.pad(wband5.reshape(K, W * Cout), ((0, Kpad - K), (0, 0)))
    wband = wband.astype(jnp.bfloat16)

    bconv = jnp.tile(conv_b.reshape(-1), W).reshape(1, W * Cout)
    bconv = bconv.astype(jnp.float32)

    # fused [priors | value] head weight, transposed to (A+1, H*W*Cout) with
    # columns permuted from torch NCHW-flatten order (c*H*W + h*W + w) to the
    # kernel's (h*W*Cout + w*Cout + c) feature order.
    wh = jnp.concatenate([w_pri, w_val], axis=1)                   # (F, A+1)
    wht = (wh.reshape(Cout, H, W, A + 1)
             .transpose(3, 1, 2, 0)
             .reshape(A + 1, H * W * Cout)).astype(jnp.bfloat16)
    bh = jnp.concatenate([b_pri, b_val], axis=1).astype(jnp.float32)  # (1, A+1)
    return wband, bconv, wht, bh


# ----------------------------------------------------------------------------
# Per-call forward (jitted): tiny input packing + one fused pallas_call
# ----------------------------------------------------------------------------
@jax.jit
def amphisbaena_forward(x_nchw, wband, bconv, wht, bh):
    B, Cin, H, W = x_nchw.shape
    Wp = W + 2
    Kpad, WC = wband.shape
    A1 = wht.shape[0]
    A = A1 - 1
    K = 3 * Wp * Cin

    # input glue: NCHW -> padded NHWC, kh bands concatenated along K, pad to Kpad
    x_nhwc = jnp.transpose(x_nchw, (0, 2, 3, 1))
    x_pad = jnp.pad(x_nhwc, ((0, 0), (1, 1), (1, 1), (0, 0)))
    x_rows = x_pad.reshape(B, H + 2, Wp * Cin)
    x_band = jnp.concatenate([x_rows[:, kh:kh + H, :] for kh in range(3)],
                             axis=-1)                        # (B, H, 3*Wp*Cin)
    x_lhs = jnp.pad(x_band.reshape(B * H, K), ((0, 0), (0, Kpad - K)))
    x_lhs = x_lhs.astype(jnp.bfloat16)

    flops = 2 * (B * H) * Kpad * WC + 2 * B * (H * WC) * A1
    bytes_accessed = (B * H * Kpad * 2 + Kpad * WC * 2 + WC * 4
                      + A1 * H * WC * 2 + A1 * 4 + B * A1 * 4)

    out = pl.pallas_call(
        amphisbaena_fused_kernel,
        out_shape=jax.ShapeDtypeStruct((B, A1), jnp.float32),
        grid=(1,),
        in_specs=[
            pl.BlockSpec((B * H, Kpad), lambda i: (0, 0)),
            pl.BlockSpec((Kpad, WC), lambda i: (0, 0)),
            pl.BlockSpec((1, WC), lambda i: (0, 0)),
            pl.BlockSpec((A1, H * WC), lambda i: (0, 0)),
            pl.BlockSpec((1, A1), lambda i: (0, 0)),
        ],
        out_specs=pl.BlockSpec((B, A1), lambda i: (0, 0)),
        compiler_params=pltpu.CompilerParams(
            dimension_semantics=("arbitrary",)),
        cost_estimate=pl.CostEstimate(flops=flops,
                                      transcendentals=B * (A + 2),
                                      bytes_accessed=bytes_accessed),
    )(x_lhs, wband, bconv, wht, bh)

    value = out[:, A:A1]
    priors = out[:, 0:A]
    return value, priors


# ----------------------------------------------------------------------------
# Deterministic parameter construction + demo run + reference check
# ----------------------------------------------------------------------------
if __name__ == "__main__":
    B, Cin, H, W = 2, 4, 16, 16      # NCHW input, matches the module's conv input
    Cout = 8
    A = 16                           # number of prior logits (actions)
    F = Cout * H * W                 # flattened feature dim = 2048

    key = jax.random.PRNGKey(0)
    k_x, k_cw, k_cb, k_wv, k_wp = jax.random.split(key, 5)

    x = jax.random.normal(k_x, (B, Cin, H, W), jnp.float32)

    conv_w = 0.1 * jax.random.normal(k_cw, (3, 3, Cin, Cout), jnp.float32)
    conv_b = 0.1 * jax.random.normal(k_cb, (Cout,), jnp.float32)

    w_val = 0.05 * jax.random.normal(k_wv, (F, 1), jnp.float32)
    b_val = jnp.zeros((1, 1), jnp.float32)
    w_pri = 0.05 * jax.random.normal(k_wp, (F, A), jnp.float32)
    b_pri = jnp.zeros((1, A), jnp.float32)

    # one-time weight packing (constant across forward calls)
    params = prepare_params(conv_w, conv_b, w_val, b_val, w_pri, b_pri, H, W)

    value, priors = amphisbaena_forward(x, *params)
    jax.block_until_ready((value, priors))

    # pure-JAX f32 reference (independent code path)
    x_nhwc = jnp.transpose(x, (0, 2, 3, 1))
    xp = jnp.pad(x_nhwc, ((0, 0), (1, 1), (1, 1), (0, 0)))
    ref_feat = jnp.zeros((B, H, W, Cout), jnp.float32)
    for kh in range(3):
        for kw in range(3):
            ref_feat = ref_feat + jnp.einsum(
                'bhwi,io->bhwo', xp[:, kh:kh + H, kw:kw + W, :], conv_w[kh, kw])
    ref_feat = jnp.maximum(ref_feat + conv_b, 0.0)
    ref_flat = jnp.transpose(ref_feat, (0, 3, 1, 2)).reshape(B, F)
    ref_value = jnp.tanh(ref_flat @ w_val + b_val)
    ref_priors = jax.nn.softmax(ref_flat @ w_pri + b_pri, axis=-1)

    assert value.shape == (B, 1) and priors.shape == (B, A)
    assert bool(jnp.all(jnp.isfinite(value))) and bool(jnp.all(jnp.isfinite(priors)))
    assert bool(jnp.allclose(jnp.sum(priors, axis=-1), 1.0, atol=1e-2))
    assert bool(jnp.allclose(value, ref_value, atol=2e-2, rtol=2e-2))
    assert bool(jnp.allclose(priors, ref_priors, atol=2e-2, rtol=2e-2))

    print("KERNEL_OK")
</pallas_src>

<mosaic_0001>
module attributes {stable_mosaic.version = 11 : i64} {
  func.func @amphisbaena_fused_kernel(%arg0: i32, %arg1: memref<32x256xbf16, #tpu.memory_space<vmem>>, %arg2: memref<256x128xbf16, #tpu.memory_space<vmem>>, %arg3: memref<1x128xf32, #tpu.memory_space<vmem>>, %arg4: memref<17x2048xbf16, #tpu.memory_space<vmem>>, %arg5: memref<1x17xf32, #tpu.memory_space<vmem>>, %arg6: memref<2x17xf32, #tpu.memory_space<vmem>>) attributes {dimension_semantics = [#tpu.dimension_semantics<arbitrary>], iteration_bounds = array<i64: 1>, scalar_prefetch = 0 : i64, scratch_operands = 0 : i64, tpu.core_type = #tpu.core_type<tc>, window_params = [{pipeline_mode = #tpu.pipeline_mode<synchronous>, transform_indices = @transform_0, window_bounds = array<i64: 32, 256>}, {pipeline_mode = #tpu.pipeline_mode<synchronous>, transform_indices = @transform_1, window_bounds = array<i64: 256, 128>}, {pipeline_mode = #tpu.pipeline_mode<synchronous>, transform_indices = @transform_2, window_bounds = array<i64: 1, 128>}, {pipeline_mode = #tpu.pipeline_mode<synchronous>, transform_indices = @transform_3, window_bounds = array<i64: 17, 2048>}, {pipeline_mode = #tpu.pipeline_mode<synchronous>, transform_indices = @transform_4, window_bounds = array<i64: 1, 17>}, {pipeline_mode = #tpu.pipeline_mode<synchronous>, transform_indices = @transform_5, window_bounds = array<i64: 2, 17>}]} {
    %c0 = arith.constant 0 : index
    %c0_0 = arith.constant 0 : index
    %0 = vector.load %arg1[%c0, %c0_0] : memref<32x256xbf16, #tpu.memory_space<vmem>>, vector<32x256xbf16>
    %c0_1 = arith.constant 0 : index
    %c0_2 = arith.constant 0 : index
    %1 = vector.load %arg2[%c0_1, %c0_2] : memref<256x128xbf16, #tpu.memory_space<vmem>>, vector<256x128xbf16>
    %cst = arith.constant dense<0.000000e+00> : vector<32x128xf32>
    %2 = tpu.matmul %0, %1, %cst {dimension_numbers = #tpu.dot_dimension_numbers<[1], [0], [0], [1], [0, 0, 1, 1], [], []>} : vector<32x256xbf16>, vector<256x128xbf16>, vector<32x128xf32> -> vector<32x128xf32>
    %c0_3 = arith.constant 0 : index
    %c0_4 = arith.constant 0 : index
    %3 = vector.load %arg3[%c0_3, %c0_4] : memref<1x128xf32, #tpu.memory_space<vmem>>, vector<1x128xf32>
    %4 = vector.broadcast %3 : vector<1x128xf32> to vector<32x128xf32>
    %5 = arith.addf %2, %4 : vector<32x128xf32>
    %cst_5 = arith.constant 0.000000e+00 : f32
    %6 = vector.broadcast %cst_5 : f32 to vector<32x128xf32>
    %7 = arith.maximumf %5, %6 : vector<32x128xf32>
    %8 = vector.shape_cast %7 : vector<32x128xf32> to vector<2x2048xf32>
    %9 = arith.truncf %8 : vector<2x2048xf32> to vector<2x2048xbf16>
    %c0_6 = arith.constant 0 : index
    %c0_7 = arith.constant 0 : index
    %10 = vector.load %arg4[%c0_6, %c0_7] : memref<17x2048xbf16, #tpu.memory_space<vmem>>, vector<17x2048xbf16>
    %cst_8 = arith.constant dense<0.000000e+00> : vector<2x17xf32>
    %11 = tpu.matmul %9, %10, %cst_8 {dimension_numbers = #tpu.dot_dimension_numbers<[1], [1], [0], [0], [0, 0, 1, 0], [], []>} : vector<2x2048xbf16>, vector<17x2048xbf16>, vector<2x17xf32> -> vector<2x17xf32>
    %c0_9 = arith.constant 0 : index
    %c0_10 = arith.constant 0 : index
    %12 = vector.load %arg5[%c0_9, %c0_10] : memref<1x17xf32, #tpu.memory_space<vmem>>, vector<1x17xf32>
    %13 = vector.broadcast %12 : vector<1x17xf32> to vector<2x17xf32>
    %14 = arith.addf %11, %13 : vector<2x17xf32>
    %15 = vector.extract_strided_slice %14 {offsets = [0, 0], sizes = [2, 16], strides = [1, 1]} : vector<2x17xf32> to vector<2x16xf32>
    %cst_11 = arith.constant dense<0xFF800000> : vector<2xf32>
    %16 = vector.multi_reduction <maximumf>, %15, %cst_11 [1] : vector<2x16xf32> to vector<2xf32>
    %17 = vector.shape_cast %16 : vector<2xf32> to vector<2x1xf32>
    %18 = vector.broadcast %17 : vector<2x1xf32> to vector<2x16xf32>
    %19 = arith.subf %15, %18 : vector<2x16xf32>
    %20 = math.exp %19 : vector<2x16xf32>
    %cst_12 = arith.constant dense<0.000000e+00> : vector<2xf32>
    %21 = vector.multi_reduction <add>, %20, %cst_12 [1] : vector<2x16xf32> to vector<2xf32>
    %22 = vector.shape_cast %21 : vector<2xf32> to vector<2x1xf32>
    %23 = tpu.reciprocal %22 {approx = true} : vector<2x1xf32> -> vector<2x1xf32>
    %24 = vector.broadcast %23 : vector<2x1xf32> to vector<2x16xf32>
    %25 = arith.mulf %20, %24 : vector<2x16xf32>
    %c0_13 = arith.constant 0 : index
    %c0_14 = arith.constant 0 : index
    %26 = vector.load %arg6[%c0_13, %c0_14] : memref<2x17xf32, #tpu.memory_space<vmem>>, vector<2x16xf32>
    tpu.vector_store %arg6[%c0_13, %c0_14], %25 {strides = array<i32>} : memref<2x17xf32, #tpu.memory_space<vmem>>, vector<2x16xf32>,
    %27 = vector.extract_strided_slice %14 {offsets = [0, 16], sizes = [2, 1], strides = [1, 1]} : vector<2x17xf32> to vector<2x1xf32>
    %28 = math.tanh %27 : vector<2x1xf32>
    %c0_15 = arith.constant 0 : index
    %c16 = arith.constant 16 : index
    %29 = vector.load %arg6[%c0_15, %c16] : memref<2x17xf32, #tpu.memory_space<vmem>>, vector<2x1xf32>
    tpu.vector_store %arg6[%c0_15, %c16], %28 {strides = array<i32>} : memref<2x17xf32, #tpu.memory_space<vmem>>, vector<2x1xf32>,
    return
  }
  func.func @transform_0(%arg0: i32) -> (i32, i32) {
    %c0_i32 = arith.constant 0 : i32
    %c0_i32_0 = arith.constant 0 : i32
    %c0_i32_1 = arith.constant 0 : i32
    return %c0_i32, %c0_i32_0 : i32, i32
  }
  func.func @transform_1(%arg0: i32) -> (i32, i32) {
    %c0_i32 = arith.constant 0 : i32
    %c0_i32_0 = arith.constant 0 : i32
    %c0_i32_1 = arith.constant 0 : i32
    return %c0_i32, %c0_i32_0 : i32, i32
  }
  func.func @transform_2(%arg0: i32) -> (i32, i32) {
    %c0_i32 = arith.constant 0 : i32
    %c0_i32_0 = arith.constant 0 : i32
    %c0_i32_1 = arith.constant 0 : i32
    return %c0_i32, %c0_i32_0 : i32, i32
  }
  func.func @transform_3(%arg0: i32) -> (i32, i32) {
    %c0_i32 = arith.constant 0 : i32
    %c0_i32_0 = arith.constant 0 : i32
    %c0_i32_1 = arith.constant 0 : i32
    return %c0_i32, %c0_i32_0 : i32, i32
  }
  func.func @transform_4(%arg0: i32) -> (i32, i32) {
    %c0_i32 = arith.constant 0 : i32
    %c0_i32_0 = arith.constant 0 : i32
    %c0_i32_1 = arith.constant 0 : i32
    return %c0_i32, %c0_i32_0 : i32, i32
  }
  func.func @transform_5(%arg0: i32) -> (i32, i32) {
    %c0_i32 = arith.constant 0 : i32
    %c0_i32_0 = arith.constant 0 : i32
    %c0_i32_1 = arith.constant 0 : i32
    return %c0_i32, %c0_i32_0 : i32, i32
  }
}

</mosaic_0001>

<llo_original>
// kernel: amphisbaena_forward.1
$region0: #{amphisbaena_forward.1}
  #allocation0 [shape = 'u32[]', space=smem, size = 0x4, offset = 0x4, fixed_abs, tag = 'smem constant byte address 0x4 - core index']
  #allocation1 [shape = 'u32[144,128]{1,0:T(1,128)}', space=vmem, size = 0x12000, scoped, tag = 'internal scratch']
  %s0 = inlined_call_operand.vmem [shape: bf16[32,256], index: 0, kind: input, shape index: {}]
  %s1 = inlined_call_operand.vmem [shape: bf16[256,128], index: 1, kind: input, shape index: {}]
  %s2 = inlined_call_operand.vmem [shape: f32[1,128], index: 2, kind: input, shape index: {}]
  %s3 = inlined_call_operand.vmem [shape: bf16[17,2048], index: 3, kind: input, shape index: {}]
  %s4 = inlined_call_operand.vmem [shape: f32[1,17], index: 4, kind: input, shape index: {}]
  %s5 = inlined_call_operand.vmem [shape: f32[2,17], index: 5, kind: output, shape index: {}]
  %s6 = sld [smem:[#allocation0]]
  $region30: #{amphisbaena_forward.1} parent=0
    _
  %s8 = ssub.s32 1, %s6
  %s9 = scalar_select 0, %s8, %s6
  // Predicated region
  $region2: #{amphisbaena_forward.1} parent=0 // pred_check
    _
  $region3: #{amphisbaena_forward.1} parent=0 // pred_check_branch
    %11 = sbr.rel (0) target = $region5
  $region4: #{amphisbaena_forward.1} parent=0 // pred_region
    _
  $region5: #{amphisbaena_forward.1} parent=0 // pred_fallthru
    _
  // Predicated region
  $region6: #{amphisbaena_forward.1} parent=0 // pred_check
    _
  $region7: #{amphisbaena_forward.1} parent=0 // pred_check_branch
    %13 = sbr.rel (0) target = $region9
  $region8: #{amphisbaena_forward.1} parent=0 // pred_region
    _
  $region9: #{amphisbaena_forward.1} parent=0 // pred_fallthru
    _
  // Predicated region
  $region10: #{amphisbaena_forward.1} parent=0 // pred_check
    _
  $region11: #{amphisbaena_forward.1} parent=0 // pred_check_branch
    %15 = sbr.rel (0) target = $region13
  $region12: #{amphisbaena_forward.1} parent=0 // pred_region
    _
  $region13: #{amphisbaena_forward.1} parent=0 // pred_fallthru
    _
  // Predicated region
  $region14: #{amphisbaena_forward.1} parent=0 // pred_check
    _
  $region15: #{amphisbaena_forward.1} parent=0 // pred_check_branch
    %17 = sbr.rel (0) target = $region17
  $region16: #{amphisbaena_forward.1} parent=0 // pred_region
    _
  $region17: #{amphisbaena_forward.1} parent=0 // pred_fallthru
    _
  // Predicated region
  $region18: #{amphisbaena_forward.1} parent=0 // pred_check
    _
  $region19: #{amphisbaena_forward.1} parent=0 // pred_check_branch
    %19 = sbr.rel (0) target = $region21
  $region20: #{amphisbaena_forward.1} parent=0 // pred_region
    _
  $region21: #{amphisbaena_forward.1} parent=0 // pred_fallthru
    _
  %v21 = vld [vmem:[%s0] sm:$0xff]
  %v22 = vld [vmem:[%s0 + $0x8] sm:$0xff]
  %v23 = vld [vmem:[%s0 + $0x10] sm:$0xff]
  %v24 = vld [vmem:[%s0 + $0x18] sm:$0xff]
  %v25 = vld [vmem:[%s1] sm:$0xf]
  %v26 = vld [vmem:[%s1 + $0x4] sm:$0xf]
  %v27 = vld [vmem:[%s1 + $0x8] sm:$0xf]
  %v28 = vld [vmem:[%s1 + $0xc] sm:$0xf]
  %v29 = vld [vmem:[%s1 + $0x10] sm:$0xf]
  %v30 = vld [vmem:[%s1 + $0x14] sm:$0xf]
  %v31 = vld [vmem:[%s1 + $0x18] sm:$0xf]
  %v32 = vld [vmem:[%s1 + $0x1c] sm:$0xf]
  %v33 = vld [vmem:[%s1 + $0x20] sm:$0xf]
  %v34 = vld [vmem:[%s1 + $0x24] sm:$0xf]
  %v35 = vld [vmem:[%s1 + $0x28] sm:$0xf]
  %v36 = vld [vmem:[%s1 + $0x2c] sm:$0xf]
  %v37 = vld [vmem:[%s1 + $0x30] sm:$0xf]
  %v38 = vld [vmem:[%s1 + $0x34] sm:$0xf]
  %v39 = vld [vmem:[%s1 + $0x38] sm:$0xf]
  %v40 = vld [vmem:[%s1 + $0x3c] sm:$0xf]
  %v41 = vld [vmem:[%s1 + $0x40] sm:$0xf]
  %v42 = vld [vmem:[%s1 + $0x44] sm:$0xf]
  %v43 = vld [vmem:[%s1 + $0x48] sm:$0xf]
  %v44 = vld [vmem:[%s1 + $0x4c] sm:$0xf]
  %v45 = vld [vmem:[%s1 + $0x50] sm:$0xf]
  %v46 = vld [vmem:[%s1 + $0x54] sm:$0xf]
  %v47 = vld [vmem:[%s1 + $0x58] sm:$0xf]
  %v48 = vld [vmem:[%s1 + $0x5c] sm:$0xf]
  %v49 = vld [vmem:[%s1 + $0x60] sm:$0xf]
  %v50 = vld [vmem:[%s1 + $0x64] sm:$0xf]
  %v51 = vld [vmem:[%s1 + $0x68] sm:$0xf]
  %v52 = vld [vmem:[%s1 + $0x6c] sm:$0xf]
  %v53 = vld [vmem:[%s1 + $0x70] sm:$0xf]
  %v54 = vld [vmem:[%s1 + $0x74] sm:$0xf]
  %v55 = vld [vmem:[%s1 + $0x78] sm:$0xf]
  %v56 = vld [vmem:[%s1 + $0x7c] sm:$0xf]
  %v57 = vld [vmem:[%s2] sm:$0x1]
  %v59 = vlaneseq
  %v60 = vshrl.u32 %v59, 7
  %v61 = vsub.s32 0, %v60
  %v62 = vrot.slane %v57, %v61
  %v68 = vunpack.c.l.b16 %v21
  %v69 = vunpack.c.h.b16 %v21
  %v70 = vunpack.c.l.b16 %v22
  %v71 = vunpack.c.h.b16 %v22
  %v72 = vunpack.c.l.b16 %v23
  %v73 = vunpack.c.h.b16 %v23
  %v74 = vunpack.c.l.b16 %v24
  %v75 = vunpack.c.h.b16 %v24
  %v76 = vpack.c.b16 %v70, %v68
  %v77 = vpack.c.b16 %v71, %v69
  %v78 = vpack.c.b16 %v74, %v72
  %v79 = vpack.c.b16 %v75, %v73
  %v116 = vunpack.c.l.b16 %v25
  %v117 = vunpack.c.l.b16 %v26
  %v118 = vunpack.c.l.b16 %v27
  %v119 = vunpack.c.l.b16 %v28
  %v120 = vunpack.c.l.b16 %v29
  %v121 = vunpack.c.l.b16 %v30
  %v122 = vunpack.c.l.b16 %v31
  %v123 = vunpack.c.l.b16 %v32
  %v124 = vunpack.c.l.b16 %v33
  %v125 = vunpack.c.l.b16 %v34
  %v126 = vunpack.c.l.b16 %v35
  %v127 = vunpack.c.l.b16 %v36
  %v128 = vunpack.c.l.b16 %v37
  %v129 = vunpack.c.l.b16 %v38
  %v130 = vunpack.c.l.b16 %v39
  %v131 = vunpack.c.l.b16 %v40
  %v132 = vunpack.c.l.b16 %v41
  %v133 = vunpack.c.l.b16 %v42
  %v134 = vunpack.c.l.b16 %v43
  %v135 = vunpack.c.l.b16 %v44
  %v136 = vunpack.c.l.b16 %v45
  %v137 = vunpack.c.l.b16 %v46
  %v138 = vunpack.c.l.b16 %v47
  %v139 = vunpack.c.l.b16 %v48
  %v140 = vunpack.c.l.b16 %v49
  %v141 = vunpack.c.l.b16 %v50
  %v142 = vunpack.c.l.b16 %v51
  %v143 = vunpack.c.l.b16 %v52
  %v144 = vunpack.c.l.b16 %v53
  %v145 = vunpack.c.l.b16 %v54
  %v146 = vunpack.c.l.b16 %v55
  %v147 = vunpack.c.l.b16 %v56
  %v148 = vpack.c.b16 %v117, %v116
  %v149 = vpack.c.b16 %v119, %v118
  %v150 = vpack.c.b16 %v121, %v120
  %v151 = vpack.c.b16 %v123, %v122
  %v152 = vpack.c.b16 %v125, %v124
  %v153 = vpack.c.b16 %v127, %v126
  %v154 = vpack.c.b16 %v129, %v128
  %v155 = vpack.c.b16 %v131, %v130
  %v156 = vpack.c.b16 %v133, %v132
  %v157 = vpack.c.b16 %v135, %v134
  %v158 = vpack.c.b16 %v137, %v136
  %v159 = vpack.c.b16 %v139, %v138
  %v160 = vpack.c.b16 %v141, %v140
  %v161 = vpack.c.b16 %v143, %v142
  %v162 = vpack.c.b16 %v145, %v144
  %v163 = vpack.c.b16 %v147, %v146
  %180 = vmatprep.subr.bf16.mxu0 0
  %181 = vmatpush1.bf16.msra.mxu0 %v148
  %182 = vmatprep.subr.bf16.mxu0 0
  %183 = vmatpush1.bf16.msra.mxu0 %v149
  %184 = vmatprep.subr.bf16.mxu0 0
  %185 = vmatpush1.bf16.msra.mxu0 %v150
  %186 = vmatprep.subr.bf16.mxu0 0
  %187 = vmatpush1.bf16.msra.mxu0 %v151
  %188 = vmatprep.subr.bf16.mxu0 0
  %189 = vmatpush1.bf16.msra.mxu0 %v152
  %190 = vmatprep.subr.bf16.mxu0 0
  %191 = vmatpush1.bf16.msra.mxu0 %v153
  %192 = vmatprep.subr.bf16.mxu0 0
  %193 = vmatpush1.bf16.msra.mxu0 %v154
  %194 = vmatprep.subr.bf16.mxu0 0
  %195 = vmatpush1.bf16.msra.mxu0 %v155
  %196 = vmatprep.subr.bf16.mxu0 0
  %197 = vmatpush1.bf16.msra.mxu0 %v156
  %198 = vmatprep.subr.bf16.mxu0 0
  %199 = vmatpush1.bf16.msra.mxu0 %v157
  %200 = vmatprep.subr.bf16.mxu0 0
  %201 = vmatpush1.bf16.msra.mxu0 %v158
  %202 = vmatprep.subr.bf16.mxu0 0
  %203 = vmatpush1.bf16.msra.mxu0 %v159
  %204 = vmatprep.subr.bf16.mxu0 0
  %205 = vmatpush1.bf16.msra.mxu0 %v160
  %206 = vmatprep.subr.bf16.mxu0 0
  %207 = vmatpush1.bf16.msra.mxu0 %v161
  %208 = vmatprep.subr.bf16.mxu0 0
  %209 = vmatpush1.bf16.msra.mxu0 %v162
  %210 = vmatprep.subr.bf16.mxu0 0
  %211 = vmatpush1.bf16.msra.mxu0 %v163
  %212 = vmatprep.mubr.bf16.mxu0 %v77
  %213 = vmatmul.mubr.bf16.gmra.mrb[0].mxu0 %v76
  %v214 = vpop.f32.mrb[0].mxu0
  %v215 = vadd.f32 %v62, %v214
  %v216 = vpop.f32.mrb[0].mxu0
  %v217 = vpop.f32.mrb[0].mxu0
  %v218 = vadd.f32 %v62, %v217
  %v219 = vpop.f32.mrb[0].mxu0
  %220 = vmatprep.mubr.bf16.mxu0 %v79
  %221 = vmatmul.mubr.bf16.gmra.mrb[0].mxu0 %v78
  %v222 = vpop.f32.mrb[0].mxu0
  %v223 = vadd.f32 %v62, %v222
  %v224 = vpop.f32.mrb[0].mxu0
  %v225 = vpop.f32.mrb[0].mxu0
  %v226 = vadd.f32 %v62, %v225
  %v227 = vpop.f32.mrb[0].mxu0
  %228 = vdwg.mxu0
  %v229 = vmax.f32 %v215, 0.0
  %v230 = vmax.f32 %v218, 0.0
  %v231 = vmax.f32 %v223, 0.0
  %v232 = vmax.f32 %v226, 0.0
  %v237 = vcombine.low %v229, %v231
  %v238 = vcombine.high %v229, %v231
  %v240 = vunpack.c.l.s4 1966171168
  %v241 = vunpack.c.0.s8 %v240
  %v242 = vlaneseq
  %v243 = vshrl.u32 %v242, 7
  %v244 = vsub.s32 %v241, %v243
  %v245 = vrot.slane %v237, %v244
  %v247 = vunpack.c.l.s4 1966171168
  %v248 = vunpack.c.0.s8 %v247
  %v249 = vlaneseq
  %v250 = vshrl.u32 %v249, 7
  %v251 = vsub.s32 %v248, %v250
  %v252 = vrot.slane %v238, %v251
  %v253 = vcombine.high %v245, %v245
  %v254 = vcombine.high %v252, %v252
  %v256 = vunpack.c.l.s4 1966171168
  %v257 = vunpack.c.0.s8 %v256
  %v258 = vlaneseq
  %v259 = vshrl.u32 %v258, 7
  %v260 = vsub.s32 %v257, %v259
  %v261 = vrot.slane %v245, %v260
  %v263 = vunpack.c.l.s4 1966171168
  %v264 = vunpack.c.0.s8 %v263
  %v265 = vlaneseq
  %v266 = vshrl.u32 %v265, 7
  %v267 = vsub.s32 %v264, %v266
  %v268 = vrot.slane %v252, %v267
  %v270 = vunpack.c.l.s4 1966171168
  %v271 = vunpack.c.0.s8 %v270
  %v272 = vlaneseq
  %v273 = vshrl.u32 %v272, 7
  %v274 = vsub.s32 %v271, %v273
  %v275 = vrot.slane %v253, %v274
  %v277 = vunpack.c.l.s4 1966171168
  %v278 = vunpack.c.0.s8 %v277
  %v279 = vlaneseq
  %v280 = vshrl.u32 %v279, 7
  %v281 = vsub.s32 %v278, %v280
  %v282 = vrot.slane %v254, %v281
  %v283 = vcombine.high %v261, %v261
  %v284 = vcombine.high %v268, %v268
  %v285 = vcombine.high %v275, %v275
  %v286 = vcombine.high %v282, %v282
  %v287 = vcombine.low %v230, %v232
  %v288 = vcombine.high %v230, %v232
  %v290 = vunpack.c.l.s4 1966171168
  %v291 = vunpack.c.0.s8 %v290
  %v292 = vlaneseq
  %v293 = vshrl.u32 %v292, 7
  %v294 = vsub.s32 %v291, %v293
  %v295 = vrot.slane %v287, %v294
  %v297 = vunpack.c.l.s4 1966171168
  %v298 = vunpack.c.0.s8 %v297
  %v299 = vlaneseq
  %v300 = vshrl.u32 %v299, 7
  %v301 = vsub.s32 %v298, %v300
  %v302 = vrot.slane %v288, %v301
  %v303 = vcombine.high %v295, %v295
  %v304 = vcombine.high %v302, %v302
  %v306 = vunpack.c.l.s4 1966171168
  %v307 = vunpack.c.0.s8 %v306
  %v308 = vlaneseq
  %v309 = vshrl.u32 %v308, 7
  %v310 = vsub.s32 %v307, %v309
  %v311 = vrot.slane %v295, %v310
  %v313 = vunpack.c.l.s4 1966171168
  %v314 = vunpack.c.0.s8 %v313
  %v315 = vlaneseq
  %v316 = vshrl.u32 %v315, 7
  %v317 = vsub.s32 %v314, %v316
  %v318 = vrot.slane %v302, %v317
  %v320 = vunpack.c.l.s4 1966171168
  %v321 = vunpack.c.0.s8 %v320
  %v322 = vlaneseq
  %v323 = vshrl.u32 %v322, 7
  %v324 = vsub.s32 %v321, %v323
  %v325 = vrot.slane %v303, %v324
  %v327 = vunpack.c.l.s4 1966171168
  %v328 = vunpack.c.0.s8 %v327
  %v329 = vlaneseq
  %v330 = vshrl.u32 %v329, 7
  %v331 = vsub.s32 %v328, %v330
  %v332 = vrot.slane %v304, %v331
  %v333 = vcombine.high %v311, %v311
  %v334 = vcombine.high %v318, %v318
  %v335 = vcombine.high %v325, %v325
  %v336 = vcombine.high %v332, %v332
  %v353 = vpack.c.bf16 %v261, %v261
  %v354 = vpack.c.bf16 %v275, %v275
  %v355 = vpack.c.bf16 %v283, %v283
  %v356 = vpack.c.bf16 %v285, %v285
  %v357 = vpack.c.bf16 %v268, %v268
  %v358 = vpack.c.bf16 %v282, %v282
  %v359 = vpack.c.bf16 %v284, %v284
  %v360 = vpack.c.bf16 %v286, %v286
  %v361 = vpack.c.bf16 %v311, %v311
  %v362 = vpack.c.bf16 %v325, %v325
  %v363 = vpack.c.bf16 %v333, %v333
  %v364 = vpack.c.bf16 %v335, %v335
  %v365 = vpack.c.bf16 %v318, %v318
  %v366 = vpack.c.bf16 %v332, %v332
  %v367 = vpack.c.bf16 %v334, %v334
  %v368 = vpack.c.bf16 %v336, %v336
  %v369 = vld [vmem:[%s3] sm:$0xff]
  %v370 = vld [vmem:[%s3 + $0x8] sm:$0xff]
  %v371 = vld [vmem:[%s3 + $0x10] sm:$0xff]
  %v372 = vld [vmem:[%s3 + $0x18] sm:$0xff]
  %v373 = vld [vmem:[%s3 + $0x20] sm:$0xff]
  %v374 = vld [vmem:[%s3 + $0x28] sm:$0xff]
  %v375 = vld [vmem:[%s3 + $0x30] sm:$0xff]
  %v376 = vld [vmem:[%s3 + $0x38] sm:$0xff]
  %v377 = vld [vmem:[%s3 + $0x40] sm:$0xff]
  %v378 = vld [vmem:[%s3 + $0x48] sm:$0xff]
  %v379 = vld [vmem:[%s3 + $0x50] sm:$0xff]
  %v380 = vld [vmem:[%s3 + $0x58] sm:$0xff]
  %v381 = vld [vmem:[%s3 + $0x60] sm:$0xff]
  %v382 = vld [vmem:[%s3 + $0x68] sm:$0xff]
  %v383 = vld [vmem:[%s3 + $0x70] sm:$0xff]
  %v384 = vld [vmem:[%s3 + $0x78] sm:$0xff]
  %v385 = vld [vmem:[%s3 + $0x80] sm:$0x11]
  %v386 = vld [vmem:[%s3 + $0x88] sm:$0x11]
  %v387 = vld [vmem:[%s3 + $0x90] sm:$0x11]
  %v388 = vld [vmem:[%s3 + $0x98] sm:$0x11]
  %v389 = vld [vmem:[%s3 + $0xa0] sm:$0x11]
  %v390 = vld [vmem:[%s3 + $0xa8] sm:$0x11]
  %v391 = vld [vmem:[%s3 + $0xb0] sm:$0x11]
  %v392 = vld [vmem:[%s3 + $0xb8] sm:$0x11]
  %v393 = vld [vmem:[%s4] sm:$0x1]
  %v395 = vlaneseq
  %v396 = vshrl.u32 %v395, 7
  %v397 = vsub.s32 0, %v396
  %v398 = vrot.slane %v393, %v397
  %v424 = vunpack.c.l.b16 %v369
  %v425 = vunpack.c.h.b16 %v369
  %v426 = vunpack.c.l.b16 %v370
  %v427 = vunpack.c.h.b16 %v370
  %v428 = vunpack.c.l.b16 %v371
  %v429 = vunpack.c.h.b16 %v371
  %v430 = vunpack.c.l.b16 %v372
  %v431 = vunpack.c.h.b16 %v372
  %v432 = vunpack.c.l.b16 %v373
  %v433 = vunpack.c.h.b16 %v373
  %v434 = vunpack.c.l.b16 %v374
  %v435 = vunpack.c.h.b16 %v374
  %v436 = vunpack.c.l.b16 %v375
  %v437 = vunpack.c.h.b16 %v375
  %v438 = vunpack.c.l.b16 %v376
  %v439 = vunpack.c.h.b16 %v376
  %v440 = vunpack.c.l.b16 %v377
  %v441 = vunpack.c.h.b16 %v377
  %v442 = vunpack.c.l.b16 %v378
  %v443 = vunpack.c.h.b16 %v378
  %v444 = vunpack.c.l.b16 %v379
  %v445 = vunpack.c.h.b16 %v379
  %v446 = vunpack.c.l.b16 %v380
  %v447 = vunpack.c.h.b16 %v380
  %v448 = vunpack.c.l.b16 %v381
  %v449 = vunpack.c.h.b16 %v381
  %v450 = vunpack.c.l.b16 %v382
  %v451 = vunpack.c.h.b16 %v382
  %v452 = vunpack.c.l.b16 %v383
  %v453 = vunpack.c.h.b16 %v383
  %v454 = vunpack.c.l.b16 %v384
  %v455 = vunpack.c.h.b16 %v384
  %v456 = vunpack.c.l.b16 %v385
  %v457 = vunpack.c.h.b16 %v385
  %v458 = vunpack.c.l.b16 %v386
  %v459 = vunpack.c.h.b16 %v386
  %v460 = vunpack.c.l.b16 %v387
  %v461 = vunpack.c.h.b16 %v387
  %v462 = vunpack.c.l.b16 %v388
  %v463 = vunpack.c.h.b16 %v388
  %v464 = vunpack.c.l.b16 %v389
  %v465 = vunpack.c.h.b16 %v389
  %v466 = vunpack.c.l.b16 %v390
  %v467 = vunpack.c.h.b16 %v390
  %v468 = vunpack.c.l.b16 %v391
  %v469 = vunpack.c.h.b16 %v391
  %v470 = vunpack.c.l.b16 %v392
  %v471 = vunpack.c.h.b16 %v392
  %v472 = vpack.c.b16 %v440, %v424
  %v473 = vpack.c.b16 %v441, %v425
  %v474 = vpack.c.b16 %v442, %v426
  %v475 = vpack.c.b16 %v443, %v427
  %v476 = vpack.c.b16 %v444, %v428
  %v477 = vpack.c.b16 %v445, %v429
  %v478 = vpack.c.b16 %v446, %v430
  %v479 = vpack.c.b16 %v447, %v431
  %v480 = vpack.c.b16 %v448, %v432
  %v481 = vpack.c.b16 %v449, %v433
  %v482 = vpack.c.b16 %v450, %v434
  %v483 = vpack.c.b16 %v451, %v435
  %v484 = vpack.c.b16 %v452, %v436
  %v485 = vpack.c.b16 %v453, %v437
  %v486 = vpack.c.b16 %v454, %v438
  %v487 = vpack.c.b16 %v455, %v439
  %v488 = vpack.c.b16 %v456, %v456
  %v489 = vpack.c.b16 %v457, %v457
  %v490 = vpack.c.b16 %v458, %v458
  %v491 = vpack.c.b16 %v459, %v459
  %v492 = vpack.c.b16 %v460, %v460
  %v493 = vpack.c.b16 %v461, %v461
  %v494 = vpack.c.b16 %v462, %v462
  %v495 = vpack.c.b16 %v463, %v463
  %v496 = vpack.c.b16 %v464, %v464
  %v497 = vpack.c.b16 %v465, %v465
  %v498 = vpack.c.b16 %v466, %v466
  %v499 = vpack.c.b16 %v467, %v467
  %v500 = vpack.c.b16 %v468, %v468
  %v501 = vpack.c.b16 %v469, %v469
  %v502 = vpack.c.b16 %v470, %v470
  %v503 = vpack.c.b16 %v471, %v471
  %536 = vmatprep.subr.bf16.mxu0 %v473
  %537 = vmatpush1.bf16.xpose.msra.mxu0 %v472
  %538 = vmatprep.subr.bf16.mxu0 %v489
  %539 = vmatpush1.bf16.xpose.msra.mxu0 %v488
  %540 = vmatprep.subr.bf16.mxu0 0
  %541 = vmatpush1.bf16.xpose.msra.mxu0 0
  %542 = vmatprep.subr.bf16.mxu0 0
  %543 = vmatpush1.bf16.xpose.msra.mxu0 0
  %544 = vmatprep.subr.bf16.mxu0 0
  %545 = vmatpush1.bf16.xpose.msra.mxu0 0
  %546 = vmatprep.subr.bf16.mxu0 0
  %547 = vmatpush1.bf16.xpose.msra.mxu0 0
  %548 = vmatprep.subr.bf16.mxu0 0
  %549 = vmatpush1.bf16.xpose.msra.mxu0 0
  %550 = vmatprep.subr.bf16.mxu0 0
  %551 = vmatpush1.bf16.xpose.msra.mxu0 0
  %552 = vmatprep.subr.bf16.mxu0 0
  %553 = vmatpush1.bf16.xpose.msra.mxu0 0
  %554 = vmatprep.subr.bf16.mxu0 0
  %555 = vmatpush1.bf16.xpose.msra.mxu0 0
  %556 = vmatprep.subr.bf16.mxu0 0
  %557 = vmatpush1.bf16.xpose.msra.mxu0 0
  %558 = vmatprep.subr.bf16.mxu0 0
  %559 = vmatpush1.bf16.xpose.msra.mxu0 0
  %560 = vmatprep.subr.bf16.mxu0 0
  %561 = vmatpush1.bf16.xpose.msra.mxu0 0
  %562 = vmatprep.subr.bf16.mxu0 0
  %563 = vmatpush1.bf16.xpose.msra.mxu0 0
  %564 = vmatprep.subr.bf16.mxu0 0
  %565 = vmatpush1.bf16.xpose.msra.mxu0 0
  %566 = vmatprep.subr.bf16.mxu0 0
  %567 = vmatpush1.bf16.xpose.msra.mxu0 0
  %568 = vmatprep.mubr.bf16.mxu0 %v354
  %569 = vmatmul.mubr.bf16.gmra.mrb[0].mxu0 %v353
  %v570 = vpop.f32.mrb[0].mxu0
  %v571 = vadd.f32 %v398, %v570
  %v572 = vpop.f32.mrb[0].mxu0
  %v573 = vpop.f32.mrb[0].mxu0
  %v574 = vpop.f32.mrb[0].mxu0
  %575 = vdwg.mxu0
  %576 = vmatprep.subr.bf16.mxu0 %v475
  %577 = vmatpush1.bf16.xpose.msra.mxu0 %v474
  %578 = vmatprep.subr.bf16.mxu0 %v491
  %579 = vmatpush1.bf16.xpose.msra.mxu0 %v490
  %580 = vmatprep.subr.bf16.mxu0 0
  %581 = vmatpush1.bf16.xpose.msra.mxu0 0
  %582 = vmatprep.subr.bf16.mxu0 0
  %583 = vmatpush1.bf16.xpose.msra.mxu0 0
  %584 = vmatprep.subr.bf16.mxu0 0
  %585 = vmatpush1.bf16.xpose.msra.mxu0 0
  %586 = vmatprep.subr.bf16.mxu0 0
  %587 = vmatpush1.bf16.xpose.msra.mxu0 0
  %588 = vmatprep.subr.bf16.mxu0 0
  %589 = vmatpush1.bf16.xpose.msra.mxu0 0
  %590 = vmatprep.subr.bf16.mxu0 0
  %591 = vmatpush1.bf16.xpose.msra.mxu0 0
  %592 = vmatprep.subr.bf16.mxu0 0
  %593 = vmatpush1.bf16.xpose.msra.mxu0 0
  %594 = vmatprep.subr.bf16.mxu0 0
  %595 = vmatpush1.bf16.xpose.msra.mxu0 0
  %596 = vmatprep.subr.bf16.mxu0 0
  %597 = vmatpush1.bf16.xpose.msra.mxu0 0
  %598 = vmatprep.subr.bf16.mxu0 0
  %599 = vmatpush1.bf16.xpose.msra.mxu0 0
  %600 = vmatprep.subr.bf16.mxu0 0
  %601 = vmatpush1.bf16.xpose.msra.mxu0 0
  %602 = vmatprep.subr.bf16.mxu0 0
  %603 = vmatpush1.bf16.xpose.msra.mxu0 0
  %604 = vmatprep.subr.bf16.mxu0 0
  %605 = vmatpush1.bf16.xpose.msra.mxu0 0
  %606 = vmatprep.subr.bf16.mxu0 0
  %607 = vmatpush1.bf16.xpose.msra.mxu0 0
  %608 = vmatprep.mubr.bf16.mxu0 %v356
  %609 = vmatmul.mubr.bf16.gmra.mrb[0].mxu0 %v355
  %v610 = vpop.f32.mrb[0].mxu0
  %v611 = vadd.f32 %v571, %v610
  %v612 = vpop.f32.mrb[0].mxu0
  %v613 = vpop.f32.mrb[0].mxu0
  %v614 = vpop.f32.mrb[0].mxu0
  %615 = vdwg.mxu0
  %616 = vmatprep.subr.bf16.mxu0 %v477
  %617 = vmatpush1.bf16.xpose.msra.mxu0 %v476
  %618 = vmatprep.subr.bf16.mxu0 %v493
  %619 = vmatpush1.bf16.xpose.msra.mxu0 %v492
  %620 = vmatprep.subr.bf16.mxu0 0
  %621 = vmatpush1.bf16.xpose.msra.mxu0 0
  %622 = vmatprep.subr.bf16.mxu0 0
  %623 = vmatpush1.bf16.xpose.msra.mxu0 0
  %624 = vmatprep.subr.bf16.mxu0 0
  %625 = vmatpush1.bf16.xpose.msra.mxu0 0
  %626 = vmatprep.subr.bf16.mxu0 0
  %627 = vmatpush1.bf16.xpose.msra.mxu0 0
  %628 = vmatprep.subr.bf16.mxu0 0
  %629 = vmatpush1.bf16.xpose.msra.mxu0 0
  %630 = vmatprep.subr.bf16.mxu0 0
  %631 = vmatpush1.bf16.xpose.msra.mxu0 0
  %632 = vmatprep.subr.bf16.mxu0 0
  %633 = vmatpush1.bf16.xpose.msra.mxu0 0
  %634 = vmatprep.subr.bf16.mxu0 0
  %635 = vmatpush1.bf16.xpose.msra.mxu0 0
  %636 = vmatprep.subr.bf16.mxu0 0
  %637 = vmatpush1.bf16.xpose.msra.mxu0 0
  %638 = vmatprep.subr.bf16.mxu0 0
  %639 = vmatpush1.bf16.xpose.msra.mxu0 0
  %640 = vmatprep.subr.bf16.mxu0 0
  %641 = vmatpush1.bf16.xpose.msra.mxu0 0
  %642 = vmatprep.subr.bf16.mxu0 0
  %643 = vmatpush1.bf16.xpose.msra.mxu0 0
  %644 = vmatprep.subr.bf16.mxu0 0
  %645 = vmatpush1.bf16.xpose.msra.mxu0 0
  %646 = vmatprep.subr.bf16.mxu0 0
  %647 = vmatpush1.bf16.xpose.msra.mxu0 0
  %648 = vmatprep.mubr.bf16.mxu0 %v358
  %649 = vmatmul.mubr.bf16.gmra.mrb[0].mxu0 %v357
  %v650 = vpop.f32.mrb[0].mxu0
  %v651 = vadd.f32 %v611, %v650
  %v652 = vpop.f32.mrb[0].mxu0
  %v653 = vpop.f32.mrb[0].mxu0
  %v654 = vpop.f32.mrb[0].mxu0
  %655 = vdwg.mxu0
  %656 = vmatprep.subr.bf16.mxu0 %v479
  %657 = vmatpush1.bf16.xpose.msra.mxu0 %v478
  %658 = vmatprep.subr.bf16.mxu0 %v495
  %659 = vmatpush1.bf16.xpose.msra.mxu0 %v494
  %660 = vmatprep.subr.bf16.mxu0 0
  %661 = vmatpush1.bf16.xpose.msra.mxu0 0
  %662 = vmatprep.subr.bf16.mxu0 0
  %663 = vmatpush1.bf16.xpose.msra.mxu0 0
  %664 = vmatprep.subr.bf16.mxu0 0
  %665 = vmatpush1.bf16.xpose.msra.mxu0 0
  %666 = vmatprep.subr.bf16.mxu0 0
  %667 = vmatpush1.bf16.xpose.msra.mxu0 0
  %668 = vmatprep.subr.bf16.mxu0 0
  %669 = vmatpush1.bf16.xpose.msra.mxu0 0
  %670 = vmatprep.subr.bf16.mxu0 0
  %671 = vmatpush1.bf16.xpose.msra.mxu0 0
  %672 = vmatprep.subr.bf16.mxu0 0
  %673 = vmatpush1.bf16.xpose.msra.mxu0 0
  %674 = vmatprep.subr.bf16.mxu0 0
  %675 = vmatpush1.bf16.xpose.msra.mxu0 0
  %676 = vmatprep.subr.bf16.mxu0 0
  %677 = vmatpush1.bf16.xpose.msra.mxu0 0
  %678 = vmatprep.subr.bf16.mxu0 0
  %679 = vmatpush1.bf16.xpose.msra.mxu0 0
  %680 = vmatprep.subr.bf16.mxu0 0
  %681 = vmatpush1.bf16.xpose.msra.mxu0 0
  %682 = vmatprep.subr.bf16.mxu0 0
  %683 = vmatpush1.bf16.xpose.msra.mxu0 0
  %684 = vmatprep.subr.bf16.mxu0 0
  %685 = vmatpush1.bf16.xpose.msra.mxu0 0
  %686 = vmatprep.subr.bf16.mxu0 0
  %687 = vmatpush1.bf16.xpose.msra.mxu0 0
  %688 = vmatprep.mubr.bf16.mxu0 %v360
  %689 = vmatmul.mubr.bf16.gmra.mrb[0].mxu0 %v359
  %v690 = vpop.f32.mrb[0].mxu0
  %v691 = vadd.f32 %v651, %v690
  %v692 = vpop.f32.mrb[0].mxu0
  %v693 = vpop.f32.mrb[0].mxu0
  %v694 = vpop.f32.mrb[0].mxu0
  %695 = vdwg.mxu0
  %696 = vmatprep.subr.bf16.mxu0 %v481
  %697 = vmatpush1.bf16.xpose.msra.mxu0 %v480
  %698 = vmatprep.subr.bf16.mxu0 %v497
  %699 = vmatpush1.bf16.xpose.msra.mxu0 %v496
  %700 = vmatprep.subr.bf16.mxu0 0
  %701 = vmatpush1.bf16.xpose.msra.mxu0 0
  %702 = vmatprep.subr.bf16.mxu0 0
  %703 = vmatpush1.bf16.xpose.msra.mxu0 0
  %704 = vmatprep.subr.bf16.mxu0 0
  %705 = vmatpush1.bf16.xpose.msra.mxu0 0
  %706 = vmatprep.subr.bf16.mxu0 0
  %707 = vmatpush1.bf16.xpose.msra.mxu0 0
  %708 = vmatprep.subr.bf16.mxu0 0
  %709 = vmatpush1.bf16.xpose.msra.mxu0 0
  %710 = vmatprep.subr.bf16.mxu0 0
  %711 = vmatpush1.bf16.xpose.msra.mxu0 0
  %712 = vmatprep.subr.bf16.mxu0 0
  %713 = vmatpush1.bf16.xpose.msra.mxu0 0
  %714 = vmatprep.subr.bf16.mxu0 0
  %715 = vmatpush1.bf16.xpose.msra.mxu0 0
  %716 = vmatprep.subr.bf16.mxu0 0
  %717 = vmatpush1.bf16.xpose.msra.mxu0 0
  %718 = vmatprep.subr.bf16.mxu0 0
  %719 = vmatpush1.bf16.xpose.msra.mxu0 0
  %720 = vmatprep.subr.bf16.mxu0 0
  %721 = vmatpush1.bf16.xpose.msra.mxu0 0
  %722 = vmatprep.subr.bf16.mxu0 0
  %723 = vmatpush1.bf16.xpose.msra.mxu0 0
  %724 = vmatprep.subr.bf16.mxu0 0
  %725 = vmatpush1.bf16.xpose.msra.mxu0 0
  %726 = vmatprep.subr.bf16.mxu0 0
  %727 = vmatpush1.bf16.xpose.msra.mxu0 0
  %728 = vmatprep.mubr.bf16.mxu0 %v362
  %729 = vmatmul.mubr.bf16.gmra.mrb[0].mxu0 %v361
  %v730 = vpop.f32.mrb[0].mxu0
  %v731 = vadd.f32 %v691, %v730
  %v732 = vpop.f32.mrb[0].mxu0
  %v733 = vpop.f32.mrb[0].mxu0
  %v734 = vpop.f32.mrb[0].mxu0
  %735 = vdwg.mxu0
  %736 = vmatprep.subr.bf16.mxu0 %v483
  %737 = vmatpush1.bf16.xpose.msra.mxu0 %v482
  %738 = vmatprep.subr.bf16.mxu0 %v499
  %739 = vmatpush1.bf16.xpose.msra.mxu0 %v498
  %740 = vmatprep.subr.bf16.mxu0 0
  %741 = vmatpush1.bf16.xpose.msra.mxu0 0
  %742 = vmatprep.subr.bf16.mxu0 0
  %743 = vmatpush1.bf16.xpose.msra.mxu0 0
  %744 = vmatprep.subr.bf16.mxu0 0
  %745 = vmatpush1.bf16.xpose.msra.mxu0 0
  %746 = vmatprep.subr.bf16.mxu0 0
  %747 = vmatpush1.bf16.xpose.msra.mxu0 0
  %748 = vmatprep.subr.bf16.mxu0 0
  %749 = vmatpush1.bf16.xpose.msra.mxu0 0
  %750 = vmatprep.subr.bf16.mxu0 0
  %751 = vmatpush1.bf16.xpose.msra.mxu0 0
  %752 = vmatprep.subr.bf16.mxu0 0
  %753 = vmatpush1.bf16.xpose.msra.mxu0 0
  %754 = vmatprep.subr.bf16.mxu0 0
  %755 = vmatpush1.bf16.xpose.msra.mxu0 0
  %756 = vmatprep.subr.bf16.mxu0 0
  %757 = vmatpush1.bf16.xpose.msra.mxu0 0
  %758 = vmatprep.subr.bf16.mxu0 0
  %759 = vmatpush1.bf16.xpose.msra.mxu0 0
  %760 = vmatprep.subr.bf16.mxu0 0
  %761 = vmatpush1.bf16.xpose.msra.mxu0 0
  %762 = vmatprep.subr.bf16.mxu0 0
  %763 = vmatpush1.bf16.xpose.msra.mxu0 0
  %764 = vmatprep.subr.bf16.mxu0 0
  %765 = vmatpush1.bf16.xpose.msra.mxu0 0
  %766 = vmatprep.subr.bf16.mxu0 0
  %767 = vmatpush1.bf16.xpose.msra.mxu0 0
  %768 = vmatprep.mubr.bf16.mxu0 %v364
  %769 = vmatmul.mubr.bf16.gmra.mrb[0].mxu0 %v363
  %v770 = vpop.f32.mrb[0].mxu0
  %v771 = vadd.f32 %v731, %v770
  %v772 = vpop.f32.mrb[0].mxu0
  %v773 = vpop.f32.mrb[0].mxu0
  %v774 = vpop.f32.mrb[0].mxu0
  %775 = vdwg.mxu0
  %776 = vmatprep.subr.bf16.mxu0 %v485
  %777 = vmatpush1.bf16.xpose.msra.mxu0 %v484
  %778 = vmatprep.subr.bf16.mxu0 %v501
  %779 = vmatpush1.bf16.xpose.msra.mxu0 %v500
  %780 = vmatprep.subr.bf16.mxu0 0
  %781 = vmatpush1.bf16.xpose.msra.mxu0 0
  %782 = vmatprep.subr.bf16.mxu0 0
  %783 = vmatpush1.bf16.xpose.msra.mxu0 0
  %784 = vmatprep.subr.bf16.mxu0 0
  %785 = vmatpush1.bf16.xpose.msra.mxu0 0
  %786 = vmatprep.subr.bf16.mxu0 0
  %787 = vmatpush1.bf16.xpose.msra.mxu0 0
  %788 = vmatprep.subr.bf16.mxu0 0
  %789 = vmatpush1.bf16.xpose.msra.mxu0 0
  %790 = vmatprep.subr.bf16.mxu0 0
  %791 = vmatpush1.bf16.xpose.msra.mxu0 0
  %792 = vmatprep.subr.bf16.mxu0 0
  %793 = vmatpush1.bf16.xpose.msra.mxu0 0
  %794 = vmatprep.subr.bf16.mxu0 0
  %795 = vmatpush1.bf16.xpose.msra.mxu0 0
  %796 = vmatprep.subr.bf16.mxu0 0
  %797 = vmatpush1.bf16.xpose.msra.mxu0 0
  %798 = vmatprep.subr.bf16.mxu0 0
  %799 = vmatpush1.bf16.xpose.msra.mxu0 0
  %800 = vmatprep.subr.bf16.mxu0 0
  %801 = vmatpush1.bf16.xpose.msra.mxu0 0
  %802 = vmatprep.subr.bf16.mxu0 0
  %803 = vmatpush1.bf16.xpose.msra.mxu0 0
  %804 = vmatprep.subr.bf16.mxu0 0
  %805 = vmatpush1.bf16.xpose.msra.mxu0 0
  %806 = vmatprep.subr.bf16.mxu0 0
  %807 = vmatpush1.bf16.xpose.msra.mxu0 0
  %808 = vmatprep.mubr.bf16.mxu0 %v366
  %809 = vmatmul.mubr.bf16.gmra.mrb[0].mxu0 %v365
  %v810 = vpop.f32.mrb[0].mxu0
  %v811 = vadd.f32 %v771, %v810
  %v812 = vpop.f32.mrb[0].mxu0
  %v813 = vpop.f32.mrb[0].mxu0
  %v814 = vpop.f32.mrb[0].mxu0
  %815 = vdwg.mxu0
  %816 = vmatprep.subr.bf16.mxu0 %v487
  %817 = vmatpush1.bf16.xpose.msra.mxu0 %v486
  %818 = vmatprep.subr.bf16.mxu0 %v503
  %819 = vmatpush1.bf16.xpose.msra.mxu0 %v502
  %820 = vmatprep.subr.bf16.mxu0 0
  %821 = vmatpush1.bf16.xpose.msra.mxu0 0
  %822 = vmatprep.subr.bf16.mxu0 0
  %823 = vmatpush1.bf16.xpose.msra.mxu0 0
  %824 = vmatprep.subr.bf16.mxu0 0
  %825 = vmatpush1.bf16.xpose.msra.mxu0 0
  %826 = vmatprep.subr.bf16.mxu0 0
  %827 = vmatpush1.bf16.xpose.msra.mxu0 0
  %828 = vmatprep.subr.bf16.mxu0 0
  %829 = vmatpush1.bf16.xpose.msra.mxu0 0
  %830 = vmatprep.subr.bf16.mxu0 0
  %831 = vmatpush1.bf16.xpose.msra.mxu0 0
  %832 = vmatprep.subr.bf16.mxu0 0
  %833 = vmatpush1.bf16.xpose.msra.mxu0 0
  %834 = vmatprep.subr.bf16.mxu0 0
  %835 = vmatpush1.bf16.xpose.msra.mxu0 0
  %836 = vmatprep.subr.bf16.mxu0 0
  %837 = vmatpush1.bf16.xpose.msra.mxu0 0
  %838 = vmatprep.subr.bf16.mxu0 0
  %839 = vmatpush1.bf16.xpose.msra.mxu0 0
  %840 = vmatprep.subr.bf16.mxu0 0
  %841 = vmatpush1.bf16.xpose.msra.mxu0 0
  %842 = vmatprep.subr.bf16.mxu0 0
  %843 = vmatpush1.bf16.xpose.msra.mxu0 0
  %844 = vmatprep.subr.bf16.mxu0 0
  %845 = vmatpush1.bf16.xpose.msra.mxu0 0
  %846 = vmatprep.subr.bf16.mxu0 0
  %847 = vmatpush1.bf16.xpose.msra.mxu0 0
  %848 = vmatprep.mubr.bf16.mxu0 %v368
  %849 = vmatmul.mubr.bf16.gmra.mrb[0].mxu0 %v367
  %v850 = vpop.f32.mrb[0].mxu0
  %v851 = vadd.f32 %v811, %v850
  %v852 = vpop.f32.mrb[0].mxu0
  %v853 = vpop.f32.mrb[0].mxu0
  %v854 = vpop.f32.mrb[0].mxu0
  %855 = vdwg.mxu0
  %vm856 = vcmask 123904
  %v857 = vsel %vm856, %v851, -inf
  %858 = vmax.xlane.f32.xlu0 %v857
  %v859 = vpop.xlane.xlu0 %858
  %v860 = vsub.f32 %v851, %v859
  %v861 = vmul.f32 %v860, 1.442695
  %v862 = vpow.pop %v861
  %v863 = vsel %vm856, %v862, 0.0
  %864 = vadd.xlane.f32.xlu0 %v863
  %v865 = vpop.xlane.xlu0 %864
  %v866 = vrcp.pop %v865
  %v867 = vmul.f32 %v862, %v866
  %868 = vst.msk [vmem:[%s5] sm:$0x3] %vm856, %v867
  %v869 = vtanh.pop %v851
  %vm870 = vcmask 132224
  %871 = vst.msk [vmem:[%s5] sm:$0x3] %vm870, %v869
  // Predicated region
  $region22: #{amphisbaena_forward.1} parent=0 // pred_check
    _
  $region23: #{amphisbaena_forward.1} parent=0 // pred_check_branch
    %873 = sbr.rel (0) target = $region25
  $region24: #{amphisbaena_forward.1} parent=0 // pred_region
    _
  $region25: #{amphisbaena_forward.1} parent=0 // pred_fallthru
    _
  // Predicated region
  $region26: #{amphisbaena_forward.1} parent=0 // pred_check
    _
  $region27: #{amphisbaena_forward.1} parent=0 // pred_check_branch
    %875 = sbr.rel (0) target = $region29
  $region28: #{amphisbaena_forward.1} parent=0 // pred_region
    _
  $region29: #{amphisbaena_forward.1} parent=0 // pred_fallthru
    _

</llo_original>
